<compile_context>
chip_gen: v7x
topology: tpu7x:2x2x1
jax: 0.10.0
libtpu: 0.0.40
codegen_flags: <defaults>
</compile_context>

<pallas_src>
import jax
import jax.numpy as jnp
from jax.experimental import pallas as pl
from jax.experimental.pallas import tpu as pltpu

_LANES = 512          # lane-dense last dim (multiple of 128)
_MAX_TILE_ROWS = 512  # 512 x 512 f32 = 1 MiB per input tile


def _vae_loss_kernel(scalars_ref, real_ref, fake_ref, mean_ref, logvar_ref,
                     loss_ref, recon_ref, kl_ref, acc_ref):
    step = pl.program_id(0)
    nsteps = pl.num_programs(0)

    @pl.when(step == 0)
    def _init():
        acc_ref[...] = jnp.zeros_like(acc_ref)

    # Squared error for this tile; upcast is fused into the subtract so bf16
    # inputs only widen in-vreg.
    diff = fake_ref[...].astype(jnp.float32) - real_ref[...].astype(jnp.float32)
    sq = diff * diff
    rows, lanes = sq.shape
    # Fold rows into the (8, LANES) accumulator: a leading-axis sum lowers to
    # plain vreg-wise VPU adds (no per-step cross-lane XLU reduce).
    acc_ref[...] += sq.reshape(rows // 8, 8, lanes).sum(axis=0)

    @pl.when(step == nsteps - 1)
    def _finalize():
        kl_beta = scalars_ref[0]
        inv_n_recon = scalars_ref[1]
        inv_n_kl = scalars_ref[2]

        # Single cross-lane collapse + divide by the true element count.
        recon = jnp.sum(acc_ref[...]) * inv_n_recon

        # KL term: computed exactly once (mean/logvar blocks are resident).
        mu = mean_ref[...].astype(jnp.float32)
        lv = logvar_ref[...].astype(jnp.float32)
        kl = -0.5 * jnp.sum(1.0 + lv - mu * mu - jnp.exp(lv)) * inv_n_kl

        recon_ref[0, 0] = recon
        kl_ref[0, 0] = kl
        loss_ref[0, 0] = recon + kl_beta * kl


def vae_loss(real_data, fake_data, mean, logvar, triplet_data, kl_beta=1.0):
    # Unpacked but unused, exactly like the PyTorch module.
    anchor, positive, negative = triplet_data
    del anchor, positive, negative

    n = real_data.size
    n_kl = mean.size

    # Lane-dense flattening with zero-padded tail (zeros contribute 0 to the
    # squared-error sum; we divide by the true element count n).
    rows = -(-n // _LANES)
    tile_rows = min(_MAX_TILE_ROWS, ((rows + 7) // 8) * 8)
    num_tiles = -(-rows // tile_rows)
    rows_padded = num_tiles * tile_rows
    padded_n = rows_padded * _LANES

    def _prep(x):
        flat = x.reshape(-1)
        if padded_n != n:
            flat = jnp.pad(flat, (0, padded_n - n))
        return flat.reshape(rows_padded, _LANES)

    r2 = _prep(real_data)
    f2 = _prep(fake_data)
    m2 = mean.reshape(1, -1)
    lv2 = logvar.reshape(1, -1)

    scalars = jnp.array([kl_beta, 1.0 / n, 1.0 / n_kl], dtype=jnp.float32)

    scalar_out = jax.ShapeDtypeStruct((1, 1), jnp.float32)
    smem_out = pl.BlockSpec((1, 1), lambda i: (0, 0), memory_space=pltpu.SMEM)

    grid_spec = pltpu.PrefetchScalarGridSpec(
        num_scalar_prefetch=0,
        grid=(num_tiles,),
        in_specs=[
            pl.BlockSpec(memory_space=pltpu.SMEM),                # [kl_beta, 1/N, 1/N_kl]
            pl.BlockSpec((tile_rows, _LANES), lambda i: (i, 0)),  # real tiles
            pl.BlockSpec((tile_rows, _LANES), lambda i: (i, 0)),  # fake tiles
            pl.BlockSpec(m2.shape, lambda i: (0, 0)),             # mean (resident)
            pl.BlockSpec(lv2.shape, lambda i: (0, 0)),            # logvar (resident)
        ],
        out_specs=(smem_out, smem_out, smem_out),
        scratch_shapes=[pltpu.VMEM((8, _LANES), jnp.float32)],
    )

    loss, recon, kl = pl.pallas_call(
        _vae_loss_kernel,
        out_shape=(scalar_out, scalar_out, scalar_out),
        grid_spec=grid_spec,
        compiler_params=pltpu.CompilerParams(
            dimension_semantics=("arbitrary",)),
    )(scalars, r2, f2, m2, lv2)

    return {
        "loss": loss[0, 0],
        "triplet_loss": jnp.array([0.0], dtype=jnp.float32),
        "recon_loss": recon[0, 0],
        "kl_divergence_loss": kl[0, 0],
    }


def _reference(real, fake, mean, logvar, kl_beta=1.0):
    recon = jnp.mean((fake - real) ** 2)
    kl = -0.5 * jnp.mean(1.0 + logvar - mean ** 2 - jnp.exp(logvar))
    return recon + kl_beta * kl, recon, kl


if __name__ == "__main__":
    key = jax.random.PRNGKey(0)
    k1, k2, k3, k4, k5, k6, k7 = jax.random.split(key, 7)

    B, C, H, W = 2, 4, 16, 16   # NCHW image data
    Z = 32                      # latent dim

    real = jax.random.normal(k1, (B, C, H, W), dtype=jnp.float32)
    fake = jax.random.normal(k2, (B, C, H, W), dtype=jnp.float32)
    mean = jax.random.normal(k3, (B, Z), dtype=jnp.float32)
    logvar = 0.1 * jax.random.normal(k4, (B, Z), dtype=jnp.float32)
    triplet = (
        jax.random.normal(k5, (B, Z), dtype=jnp.float32),
        jax.random.normal(k6, (B, Z), dtype=jnp.float32),
        jax.random.normal(k7, (B, Z), dtype=jnp.float32),
    )

    out = vae_loss(real, fake, mean, logvar, triplet, kl_beta=1.0)
    jax.block_until_ready(out)

    ref_loss, ref_recon, ref_kl = _reference(real, fake, mean, logvar, 1.0)
    assert jnp.allclose(out["recon_loss"], ref_recon, rtol=1e-5, atol=1e-5)
    assert jnp.allclose(out["kl_divergence_loss"], ref_kl, rtol=1e-5, atol=1e-5)
    assert jnp.allclose(out["loss"], ref_loss, rtol=1e-5, atol=1e-5)
    assert jnp.allclose(out["triplet_loss"], jnp.array([0.0]))

    print("KERNEL_OK")
</pallas_src>

<mosaic_0001>
module attributes {stable_mosaic.version = 11 : i64} {
  func.func @_vae_loss_kernel(%arg0: i32, %arg1: memref<3xf32, #tpu.memory_space<smem>>, %arg2: memref<8x512xf32, #tpu.memory_space<vmem>>, %arg3: memref<8x512xf32, #tpu.memory_space<vmem>>, %arg4: memref<1x64xf32, #tpu.memory_space<vmem>>, %arg5: memref<1x64xf32, #tpu.memory_space<vmem>>, %arg6: memref<1x1xf32, #tpu.memory_space<smem>>, %arg7: memref<1x1xf32, #tpu.memory_space<smem>>, %arg8: memref<1x1xf32, #tpu.memory_space<smem>>, %arg9: memref<8x512xf32, #tpu.memory_space<vmem>>) attributes {dimension_semantics = [#tpu.dimension_semantics<arbitrary>], iteration_bounds = array<i64: 1>, scalar_prefetch = 0 : i64, scratch_operands = 1 : i64, tpu.core_type = #tpu.core_type<tc>, window_params = [{transform_indices = @transform_0, window_bounds = array<i64: 3>}, {transform_indices = @transform_1, window_bounds = array<i64: 8, 512>}, {transform_indices = @transform_2, window_bounds = array<i64: 8, 512>}, {pipeline_mode = #tpu.pipeline_mode<synchronous>, transform_indices = @transform_3, window_bounds = array<i64: 1, 64>}, {pipeline_mode = #tpu.pipeline_mode<synchronous>, transform_indices = @transform_4, window_bounds = array<i64: 1, 64>}, {transform_indices = @transform_5, window_bounds = array<i64: 1, 1>}, {transform_indices = @transform_6, window_bounds = array<i64: 1, 1>}, {transform_indices = @transform_7, window_bounds = array<i64: 1, 1>}]} {
    %c0_i32 = arith.constant 0 : i32
    %0 = arith.cmpi eq, %arg0, %c0_i32 : i32
    %1 = arith.extui %0 : i1 to i32
    %c0_i32_0 = arith.constant 0 : i32
    %2 = arith.cmpi ne, %1, %c0_i32_0 : i32
    scf.if %2 {
      %cst_10 = arith.constant 0.000000e+00 : f32
      %15 = vector.broadcast %cst_10 : f32 to vector<8x512xf32>
      %c0_11 = arith.constant 0 : index
      %c0_12 = arith.constant 0 : index
      %16 = vector.load %arg9[%c0_11, %c0_12] : memref<8x512xf32, #tpu.memory_space<vmem>>, vector<8x512xf32>
      tpu.vector_store %arg9[%c0_11, %c0_12], %15 {strides = array<i32>} : memref<8x512xf32, #tpu.memory_space<vmem>>, vector<8x512xf32>,
    } else {
    }
    %c0 = arith.constant 0 : index
    %c0_1 = arith.constant 0 : index
    %3 = vector.load %arg3[%c0, %c0_1] : memref<8x512xf32, #tpu.memory_space<vmem>>, vector<8x512xf32>
    %c0_2 = arith.constant 0 : index
    %c0_3 = arith.constant 0 : index
    %4 = vector.load %arg2[%c0_2, %c0_3] : memref<8x512xf32, #tpu.memory_space<vmem>>, vector<8x512xf32>
    %5 = arith.subf %3, %4 : vector<8x512xf32>
    %6 = arith.mulf %5, %5 : vector<8x512xf32>
    %c0_4 = arith.constant 0 : index
    %c0_5 = arith.constant 0 : index
    %7 = vector.load %arg9[%c0_4, %c0_5] : memref<8x512xf32, #tpu.memory_space<vmem>>, vector<8x512xf32>
    %8 = vector.shape_cast %6 : vector<8x512xf32> to vector<1x8x512xf32>
    %cst = arith.constant dense<0.000000e+00> : vector<8x512xf32>
    %9 = vector.multi_reduction <add>, %8, %cst [0] : vector<1x8x512xf32> to vector<8x512xf32>
    %10 = arith.addf %7, %9 : vector<8x512xf32>
    %c0_6 = arith.constant 0 : index
    %c0_7 = arith.constant 0 : index
    %11 = vector.load %arg9[%c0_6, %c0_7] : memref<8x512xf32, #tpu.memory_space<vmem>>, vector<8x512xf32>
    tpu.vector_store %arg9[%c0_6, %c0_7], %10 {strides = array<i32>} : memref<8x512xf32, #tpu.memory_space<vmem>>, vector<8x512xf32>,
    %c0_i32_8 = arith.constant 0 : i32
    %12 = arith.cmpi eq, %arg0, %c0_i32_8 : i32
    %13 = arith.extui %12 : i1 to i32
    %c0_i32_9 = arith.constant 0 : i32
    %14 = arith.cmpi ne, %13, %c0_i32_9 : i32
    scf.if %14 {
      %c0_10 = arith.constant 0 : index
      %15 = memref.load %arg1[%c0_10] : memref<3xf32, #tpu.memory_space<smem>>
      %c1 = arith.constant 1 : index
      %16 = memref.load %arg1[%c1] : memref<3xf32, #tpu.memory_space<smem>>
      %c2 = arith.constant 2 : index
      %17 = memref.load %arg1[%c2] : memref<3xf32, #tpu.memory_space<smem>>
      %c0_11 = arith.constant 0 : index
      %c0_12 = arith.constant 0 : index
      %18 = vector.load %arg9[%c0_11, %c0_12] : memref<8x512xf32, #tpu.memory_space<vmem>>, vector<8x512xf32>
      %19 = vector.shape_cast %18 : vector<8x512xf32> to vector<1x8x512xf32>
      %cst_13 = arith.constant dense<0.000000e+00> : vector<1xf32>
      %20 = vector.multi_reduction <add>, %19, %cst_13 [1, 2] : vector<1x8x512xf32> to vector<1xf32>
      %21 = vector.shape_cast %20 : vector<1xf32> to vector<1x1x1xf32>
      %22 = vector.extract %21[0, 0, 0] : f32 from vector<1x1x1xf32>
      %23 = arith.mulf %22, %16 : f32
      %c0_14 = arith.constant 0 : index
      %c0_15 = arith.constant 0 : index
      %24 = vector.load %arg4[%c0_14, %c0_15] : memref<1x64xf32, #tpu.memory_space<vmem>>, vector<1x64xf32>
      %c0_16 = arith.constant 0 : index
      %c0_17 = arith.constant 0 : index
      %25 = vector.load %arg5[%c0_16, %c0_17] : memref<1x64xf32, #tpu.memory_space<vmem>>, vector<1x64xf32>
      %cst_18 = arith.constant 1.000000e+00 : f32
      %26 = vector.broadcast %cst_18 : f32 to vector<1x64xf32>
      %27 = arith.addf %26, %25 : vector<1x64xf32>
      %28 = arith.mulf %24, %24 : vector<1x64xf32>
      %29 = arith.subf %27, %28 : vector<1x64xf32>
      %30 = math.exp %25 : vector<1x64xf32>
      %31 = arith.subf %29, %30 : vector<1x64xf32>
      %32 = vector.shape_cast %31 : vector<1x64xf32> to vector<1x1x64xf32>
      %cst_19 = arith.constant dense<0.000000e+00> : vector<1xf32>
      %33 = vector.multi_reduction <add>, %32, %cst_19 [1, 2] : vector<1x1x64xf32> to vector<1xf32>
      %34 = vector.shape_cast %33 : vector<1xf32> to vector<1x1x1xf32>
      %35 = vector.extract %34[0, 0, 0] : f32 from vector<1x1x1xf32>
      %cst_20 = arith.constant -5.000000e-01 : f32
      %36 = arith.mulf %cst_20, %35 : f32
      %37 = arith.mulf %36, %17 : f32
      %c0_21 = arith.constant 0 : index
      %c0_22 = arith.constant 0 : index
      %38 = memref.load %arg7[%c0_21, %c0_22] : memref<1x1xf32, #tpu.memory_space<smem>>
      memref.store %23, %arg7[%c0_21, %c0_22] : memref<1x1xf32, #tpu.memory_space<smem>>
      %c0_23 = arith.constant 0 : index
      %c0_24 = arith.constant 0 : index
      %39 = memref.load %arg8[%c0_23, %c0_24] : memref<1x1xf32, #tpu.memory_space<smem>>
      memref.store %37, %arg8[%c0_23, %c0_24] : memref<1x1xf32, #tpu.memory_space<smem>>
      %40 = arith.mulf %15, %37 : f32
      %41 = arith.addf %23, %40 : f32
      %c0_25 = arith.constant 0 : index
      %c0_26 = arith.constant 0 : index
      %42 = memref.load %arg6[%c0_25, %c0_26] : memref<1x1xf32, #tpu.memory_space<smem>>
      memref.store %41, %arg6[%c0_25, %c0_26] : memref<1x1xf32, #tpu.memory_space<smem>>
    } else {
    }
    return
  }
  func.func @transform_0(%arg0: i32) -> i32 {
    %c0_i32 = arith.constant 0 : i32
    %c0_i32_0 = arith.constant 0 : i32
    return %c0_i32 : i32
  }
  func.func @transform_1(%arg0: i32) -> (i32, i32) {
    %c0_i32 = arith.constant 0 : i32
    %c0_i32_0 = arith.constant 0 : i32
    return %arg0, %c0_i32 : i32, i32
  }
  func.func @transform_2(%arg0: i32) -> (i32, i32) {
    %c0_i32 = arith.constant 0 : i32
    %c0_i32_0 = arith.constant 0 : i32
    return %arg0, %c0_i32 : i32, i32
  }
  func.func @transform_3(%arg0: i32) -> (i32, i32) {
    %c0_i32 = arith.constant 0 : i32
    %c0_i32_0 = arith.constant 0 : i32
    %c0_i32_1 = arith.constant 0 : i32
    return %c0_i32, %c0_i32_0 : i32, i32
  }
  func.func @transform_4(%arg0: i32) -> (i32, i32) {
    %c0_i32 = arith.constant 0 : i32
    %c0_i32_0 = arith.constant 0 : i32
    %c0_i32_1 = arith.constant 0 : i32
    return %c0_i32, %c0_i32_0 : i32, i32
  }
  func.func @transform_5(%arg0: i32) -> (i32, i32) {
    %c0_i32 = arith.constant 0 : i32
    %c0_i32_0 = arith.constant 0 : i32
    %c0_i32_1 = arith.constant 0 : i32
    return %c0_i32, %c0_i32_0 : i32, i32
  }
  func.func @transform_6(%arg0: i32) -> (i32, i32) {
    %c0_i32 = arith.constant 0 : i32
    %c0_i32_0 = arith.constant 0 : i32
    %c0_i32_1 = arith.constant 0 : i32
    return %c0_i32, %c0_i32_0 : i32, i32
  }
  func.func @transform_7(%arg0: i32) -> (i32, i32) {
    %c0_i32 = arith.constant 0 : i32
    %c0_i32_0 = arith.constant 0 : i32
    %c0_i32_1 = arith.constant 0 : i32
    return %c0_i32, %c0_i32_0 : i32, i32
  }
}

</mosaic_0001>

<llo_original>
// kernel: tpu_custom_call.1
$region0: #{tpu_custom_call.1}
  #allocation0 [shape = 'u32[]', space=smem, size = 0x4, offset = 0x4, fixed_abs, tag = 'smem constant byte address 0x4 - core index']
  #allocation1 [shape = 'u32[144,128]{1,0:T(1,128)}', space=vmem, size = 0x12000, scoped, tag = 'internal scratch']
  #allocation2 [shape = 'f32[8,512]{1,0:T(8,128)}', space=vmem, size = 0x4000, scoped, tag = 'scratch operand']
  %s0 = inlined_call_operand.hbm [shape: f32[3], index: 0, kind: input, shape index: {}]
  %s1 = inlined_call_operand.hbm [shape: f32[8,512], index: 1, kind: input, shape index: {}]
  %s2 = inlined_call_operand.hbm [shape: f32[8,512], index: 2, kind: input, shape index: {}]
  %s3 = inlined_call_operand.vmem [shape: f32[1,64], index: 3, kind: input, shape index: {}]
  %s4 = inlined_call_operand.vmem [shape: f32[1,64], index: 4, kind: input, shape index: {}]
  %s5 = inlined_call_operand.hbm [shape: f32[1,1], index: 5, kind: output, shape index: {0}]
  %s6 = inlined_call_operand.hbm [shape: f32[1,1], index: 6, kind: output, shape index: {1}]
  %s7 = inlined_call_operand.hbm [shape: f32[1,1], index: 7, kind: output, shape index: {2}]
  %8 = xla_tuple %s5, %s6, %s7
  %s9 = sld [smem:[#allocation0]]
  $region66: #{tpu_custom_call.1} parent=0
    _
  %s11 = ssub.s32 1, %s9
  %s12 = scalar_select 0, %s11, %s9
  $region1: #{tpu_custom_call.1} parent=0
    #allocation3 [shape = 'u8[512]{0}', space=smem, size = 0x200, scoped, tag = 'input window, operand 0, single buffered']
    #allocation4 [shape = 's32[1]{0}', space=sflag, size = 0x4, scoped, tag = 'scoped memory for tpu_custom_call.1']
    #allocation5 [shape = 's32[1]{0}', space=sflag, size = 0x4, scoped, tag = 'scoped memory for tpu_custom_call.1']
    #allocation6 [shape = 's32[1]{0}', space=sflag, size = 0x4, scoped, tag = 'scoped memory for tpu_custom_call.1']
    #allocation7 [shape = 'u8[16384]{0}', space=vmem, size = 0x4000, scoped, tag = 'input window, operand 1, single buffered']
    #allocation8 [shape = 'u8[16384]{0}', space=vmem, size = 0x4000, scoped, tag = 'input window, operand 2, single buffered']
    #allocation9 [shape = 's32[1]{0}', space=sflag, size = 0x4, scoped, tag = 'scoped memory for tpu_custom_call.1']
    #allocation10 [shape = 'u8[512]{0}', space=smem, size = 0x200, scoped, tag = 'output window, operand 0, single buffered']
    #allocation11 [shape = 'u8[512]{0}', space=smem, size = 0x200, scoped, tag = 'output window, operand 1, single buffered']
    #allocation12 [shape = 's32[1]{0}', space=sflag, size = 0x4, scoped, tag = 'scoped memory for tpu_custom_call.1']
    #allocation13 [shape = 'u8[512]{0}', space=smem, size = 0x200, scoped, tag = 'output window, operand 2, single buffered']
    %13 = vsyncpa [#allocation5], 0
    %14 = vsyncpa [#allocation4], 0
    %15 = vsyncpa [#allocation9], 0
    %16 = vsyncpa [#allocation6], 0
    %17 = vsyncpa [#allocation12], 0
    // Predicated region
    $region2: #{tpu_custom_call.1} parent=1 // pred_check
      _
    $region3: #{tpu_custom_call.1} parent=1 // pred_check_branch
      %19 = sbr.rel (0) target = $region5
    $region4: #{tpu_custom_call.1} parent=1 // pred_region
      %s21 = ssub.s32 16, 16
      %22 = vsyncadd [#allocation5], %s21
      %25 = dma.hbm_to_smem %s0, 16, [#allocation3], [#allocation5]
    $region5: #{tpu_custom_call.1} parent=1 // pred_fallthru
      _
    // Predicated region
    $region6: #{tpu_custom_call.1} parent=1 // pred_check
      _
    $region7: #{tpu_custom_call.1} parent=1 // pred_check_branch
      %27 = sbr.rel (0) target = $region9
    $region8: #{tpu_custom_call.1} parent=1 // pred_region
      %s29 = ssub.s32 512, 512
      %30 = vsyncadd [#allocation4], %s29
      %s32 = sshll.u32 [#allocation7], 4
      %s33 = int_to_ptr.vmem [resolvable:$true] %s32
      %35 = dma.hbm_to_vmem [thread:$0]  %s1, 512, %s33, [#allocation4]
    $region9: #{tpu_custom_call.1} parent=1 // pred_fallthru
      _
    // Predicated region
    $region10: #{tpu_custom_call.1} parent=1 // pred_check
      _
    $region11: #{tpu_custom_call.1} parent=1 // pred_check_branch
      %37 = sbr.rel (0) target = $region13
    $region12: #{tpu_custom_call.1} parent=1 // pred_region
      %s39 = ssub.s32 512, 512
      %40 = vsyncadd [#allocation9], %s39
      %s42 = sshll.u32 [#allocation8], 4
      %s43 = int_to_ptr.vmem [resolvable:$true] %s42
      %45 = dma.hbm_to_vmem [thread:$0]  %s2, 512, %s43, [#allocation9]
    $region13: #{tpu_custom_call.1} parent=1 // pred_fallthru
      _
    // Predicated region
    $region14: #{tpu_custom_call.1} parent=1 // pred_check
      _
    $region15: #{tpu_custom_call.1} parent=1 // pred_check_branch
      %47 = sbr.rel (0) target = $region17
    $region16: #{tpu_custom_call.1} parent=1 // pred_region
      _
    $region17: #{tpu_custom_call.1} parent=1 // pred_fallthru
      _
    // Predicated region
    $region18: #{tpu_custom_call.1} parent=1 // pred_check
      _
    $region19: #{tpu_custom_call.1} parent=1 // pred_check_branch
      %49 = sbr.rel (0) target = $region21
    $region20: #{tpu_custom_call.1} parent=1 // pred_region
      _
    $region21: #{tpu_custom_call.1} parent=1 // pred_fallthru
      _
    // Predicated region
    $region22: #{tpu_custom_call.1} parent=1 // pred_check
      _
    $region23: #{tpu_custom_call.1} parent=1 // pred_check_branch
      %51 = sbr.rel (0) target = $region25
    $region24: #{tpu_custom_call.1} parent=1 // pred_region
      %52 = dma.done [#allocation5], 16
    $region25: #{tpu_custom_call.1} parent=1 // pred_fallthru
      _
    // Predicated region
    $region26: #{tpu_custom_call.1} parent=1 // pred_check
      _
    $region27: #{tpu_custom_call.1} parent=1 // pred_check_branch
      %54 = sbr.rel (0) target = $region29
    $region28: #{tpu_custom_call.1} parent=1 // pred_region
      %55 = dma.done [#allocation4], 512
    $region29: #{tpu_custom_call.1} parent=1 // pred_fallthru
      _
    // Predicated region
    $region30: #{tpu_custom_call.1} parent=1 // pred_check
      _
    $region31: #{tpu_custom_call.1} parent=1 // pred_check_branch
      %57 = sbr.rel (0) target = $region33
    $region32: #{tpu_custom_call.1} parent=1 // pred_region
      %58 = dma.done [#allocation9], 512
    $region33: #{tpu_custom_call.1} parent=1 // pred_fallthru
      _
    %59 = sfence
    %p60 = scmp.eq.s32.totalorder 0, 0
    // Predicated region
    $region34: #{tpu_custom_call.1} parent=1 // pred_check
      %p61 = pneg %p60
    $region35: #{tpu_custom_call.1} parent=1 // pred_check_branch
      %63 = sbr.rel (%p61) target = $region37
    $region36: #{tpu_custom_call.1} parent=1 // pred_region
      %64 = vst [vmem:[#allocation2] sm:$0xff] 0.0
      %65 = vst [vmem:[#allocation2 + $0x8] sm:$0xff] 0.0
      %66 = vst [vmem:[#allocation2 + $0x10] sm:$0xff] 0.0
      %67 = vst [vmem:[#allocation2 + $0x18] sm:$0xff] 0.0
    $region37: #{tpu_custom_call.1} parent=1 // pred_fallthru
      _
    %v68 = vld [vmem:[#allocation8] sm:$0xff]
    %v69 = vld [vmem:[#allocation8 + $0x8] sm:$0xff]
    %v70 = vld [vmem:[#allocation8 + $0x10] sm:$0xff]
    %v71 = vld [vmem:[#allocation8 + $0x18] sm:$0xff]
    %v72 = vld [vmem:[#allocation7] sm:$0xff]
    %v73 = vld [vmem:[#allocation7 + $0x8] sm:$0xff]
    %v74 = vld [vmem:[#allocation7 + $0x10] sm:$0xff]
    %v75 = vld [vmem:[#allocation7 + $0x18] sm:$0xff]
    %v76 = vsub.f32 %v68, %v72
    %v77 = vsub.f32 %v69, %v73
    %v78 = vsub.f32 %v70, %v74
    %v79 = vsub.f32 %v71, %v75
    %v80 = vmul.f32 %v76, %v76
    %v81 = vmul.f32 %v77, %v77
    %v82 = vmul.f32 %v78, %v78
    %v83 = vmul.f32 %v79, %v79
    %v84 = vld [vmem:[#allocation2] sm:$0xff]
    %v85 = vld [vmem:[#allocation2 + $0x8] sm:$0xff]
    %v86 = vld [vmem:[#allocation2 + $0x10] sm:$0xff]
    %v87 = vld [vmem:[#allocation2 + $0x18] sm:$0xff]
    %v88 = vadd.f32 %v80, 0.0
    %v89 = vadd.f32 %v81, 0.0
    %v90 = vadd.f32 %v82, 0.0
    %v91 = vadd.f32 %v83, 0.0
    %v92 = vadd.f32 %v84, %v88
    %v93 = vadd.f32 %v85, %v89
    %v94 = vadd.f32 %v86, %v90
    %v95 = vadd.f32 %v87, %v91
    %96 = vst [vmem:[#allocation2] sm:$0xff] %v92
    %97 = vst [vmem:[#allocation2 + $0x8] sm:$0xff] %v93
    %98 = vst [vmem:[#allocation2 + $0x10] sm:$0xff] %v94
    %99 = vst [vmem:[#allocation2 + $0x18] sm:$0xff] %v95
    // Predicated region
    $region38: #{tpu_custom_call.1} parent=1 // pred_check
      %p100 = pneg %p60
    $region39: #{tpu_custom_call.1} parent=1 // pred_check_branch
      %102 = sbr.rel (%p100) target = $region41
    $region40: #{tpu_custom_call.1} parent=1 // pred_region
      %s103 = sld [smem:[#allocation3]]
      %s104 = sld [smem:[#allocation3 + $0x1]]
      %s105 = sld [smem:[#allocation3 + $0x2]]
      %v106 = vld [vmem:[#allocation2] sm:$0xff]
      %v107 = vld [vmem:[#allocation2 + $0x8] sm:$0xff]
      %v108 = vld [vmem:[#allocation2 + $0x10] sm:$0xff]
      %v109 = vld [vmem:[#allocation2 + $0x18] sm:$0xff]
      %v110 = vadd.f32 %v106, %v107
      %v111 = vadd.f32 %v110, %v108
      %v112 = vadd.f32 %v111, %v109
      %113 = vadd.xlane.f32.xlu0 %v112
      %v114 = vpop.xlane.xlu0 %113
      %v115 = vrot.slane %v114, 4
      %v116 = vadd.f32 %v114, %v115
      %v117 = vrot.slane %v116, 2
      %v118 = vadd.f32 %v116, %v117
      %v119 = vrot.slane %v118, 1
      %v120 = vadd.f32 %v118, %v119
      %s121 = vtos %v120
      %s122 = smul.f32 %s121, %s104
      %v123 = vld [vmem:[%s3] sm:$0x1]
      %v124 = vld [vmem:[%s4] sm:$0x1]
      %v125 = vadd.f32 %v124, 1.0
      %v126 = vmul.f32 %v123, %v123
      %v127 = vsub.f32 %v125, %v126
      %v128 = vmul.f32 %v124, 1.442695
      %v129 = vpow.pop %v128
      %v130 = vsub.f32 %v127, %v129
      %vm131 = vcmask 516096
      %v132 = vsel %vm131, %v130, 0.0
      %133 = vadd.xlane.f32.xlu0 %v132
      %v134 = vpop.xlane.xlu0 %133
      %v135 = vrot.slane %v134, 4
      %v136 = vadd.f32 %v134, %v135
      %v137 = vrot.slane %v136, 2
      %v138 = vadd.f32 %v136, %v137
      %v139 = vrot.slane %v138, 1
      %v140 = vadd.f32 %v138, %v139
      %s141 = vtos %v140
      %s142 = smul.f32 %s141, -0.5
      %s143 = smul.f32 %s142, %s105
      %s144 = scalar_lea.smem [#allocation11], 0
      %145 = sst [smem:[%s144]] %s122
      %s146 = scalar_lea.smem [#allocation13], 0
      %147 = sst [smem:[%s146]] %s143
      %s148 = smul.f32 %s103, %s143
      %s149 = sadd.f32 %s122, %s148
      %s150 = scalar_lea.smem [#allocation10], 0
      %151 = sst [smem:[%s150]] %s149
    $region41: #{tpu_custom_call.1} parent=1 // pred_fallthru
      _
    // Predicated region
    $region42: #{tpu_custom_call.1} parent=1 // pred_check
      _
    $region43: #{tpu_custom_call.1} parent=1 // pred_check_branch
      %153 = sbr.rel (0) target = $region45
    $region44: #{tpu_custom_call.1} parent=1 // pred_region
      %s155 = ssub.s32 16, 16
      %156 = vsyncadd [#allocation6], %s155
      %159 = dma.smem_to_hbm [#allocation10], 16, %s5, [#allocation6]
    $region45: #{tpu_custom_call.1} parent=1 // pred_fallthru
      _
    // Predicated region
    $region46: #{tpu_custom_call.1} parent=1 // pred_check
      _
    $region47: #{tpu_custom_call.1} parent=1 // pred_check_branch
      %161 = sbr.rel (0) target = $region49
    $region48: #{tpu_custom_call.1} parent=1 // pred_region
      %s163 = ssub.s32 16, 16
      %164 = vsyncadd [#allocation12], %s163
      %167 = dma.smem_to_hbm [#allocation11], 16, %s6, [#allocation12]
    $region49: #{tpu_custom_call.1} parent=1 // pred_fallthru
      _
    // Predicated region
    $region50: #{tpu_custom_call.1} parent=1 // pred_check
      _
    $region51: #{tpu_custom_call.1} parent=1 // pred_check_branch
      %169 = sbr.rel (0) target = $region53
    $region52: #{tpu_custom_call.1} parent=1 // pred_region
      %s171 = ssub.s32 16, 16
      %172 = vsyncadd [#allocation12], %s171
      %175 = dma.smem_to_hbm [#allocation13], 16, %s7, [#allocation12]
    $region53: #{tpu_custom_call.1} parent=1 // pred_fallthru
      _
    // Predicated region
    $region54: #{tpu_custom_call.1} parent=1 // pred_check
      _
    $region55: #{tpu_custom_call.1} parent=1 // pred_check_branch
      %177 = sbr.rel (0) target = $region57
    $region56: #{tpu_custom_call.1} parent=1 // pred_region
      %178 = dma.done [#allocation6], 16
    $region57: #{tpu_custom_call.1} parent=1 // pred_fallthru
      _
    // Predicated region
    $region58: #{tpu_custom_call.1} parent=1 // pred_check
      _
    $region59: #{tpu_custom_call.1} parent=1 // pred_check_branch
      %180 = sbr.rel (0) target = $region61
    $region60: #{tpu_custom_call.1} parent=1 // pred_region
      %181 = dma.done [#allocation12], 16
    $region61: #{tpu_custom_call.1} parent=1 // pred_fallthru
      _
    // Predicated region
    $region62: #{tpu_custom_call.1} parent=1 // pred_check
      _
    $region63: #{tpu_custom_call.1} parent=1 // pred_check_branch
      %183 = sbr.rel (0) target = $region65
    $region64: #{tpu_custom_call.1} parent=1 // pred_region
      %184 = dma.done [#allocation12], 16
    $region65: #{tpu_custom_call.1} parent=1 // pred_fallthru
      _
    %185 = sfence
    %186 = vsyncpa [#allocation4], 1
    %187 = vsyncpa [#allocation9], 1
    %188 = vsyncpa [#allocation5], 1
    %189 = vsyncpa [#allocation6], 1
    %190 = vsyncpa [#allocation12], 1

</llo_original>
